<compile_context>
chip_gen: v6e
topology: v6e:2x2x1
jax: 0.10.0
libtpu: 0.0.40
codegen_flags: <defaults>
</compile_context>

<pallas_src>
import jax
import jax.numpy as jnp
from jax.experimental import pallas as pl
from jax.experimental.pallas import tpu as pltpu


def _conv1x1_kernel(x_ref, w_ref, b_ref, o_ref):
    # x_ref: (C_in, tn)    activation tile, spatial axis lane-dense
    # w_ref: (C_out, C_in) resident weight
    # b_ref: (C_out, 1)    resident bias
    # o_ref: (C_out, tn)   lane-dense output tile
    acc = jnp.dot(
        w_ref[...],
        x_ref[...],
        preferred_element_type=jnp.float32,
        precision=jax.lax.Precision.HIGHEST,
    )
    o_ref[...] = (acc + b_ref[...].astype(jnp.float32)).astype(o_ref.dtype)


def _sublane_pack(itemsize):
    # f32 -> 8 sublanes/vreg, bf16 -> 16, int8/fp8 -> 32.
    return max(8, 32 // max(1, itemsize))


def _pad_to(v, m):
    return -(-v // m) * m


def _default_vmem_budget_bytes():
    """Per-generation budget for the double-buffered activation/output tiles."""
    try:
        kind = jax.devices()[0].device_kind.lower()
    except Exception:
        kind = ""
    if "v6" in kind or "trillium" in kind:
        return 20 * 1024 * 1024   # 32 MiB scoped default, 128 MiB physical
    if "v5 lite" in kind or "v5lite" in kind or "v5e" in kind:
        return 6 * 1024 * 1024    # 16 MiB scoped default
    return 8 * 1024 * 1024        # v7x (64 MiB physical / TC) & others


def _pick_spatial_tile(n, batch, c_in, c_out, in_itemsize, out_itemsize,
                       vmem_budget_bytes, target_steps=8):
    """Lane-dense spatial tile: a multiple of 128, or the full dim if tiny.

    Caps the tile so that (a) the double-buffered, sublane-PADDED working set
    fits the VMEM budget and (b) the grid has >= target_steps total steps
    (~4 per TensorCore on v7x), so input DMA / compute / output DMA actually
    pipeline across steps instead of serializing.
    """
    if n <= 128:
        return n
    c_in_pad = _pad_to(c_in, _sublane_pack(in_itemsize))
    c_out_pad = _pad_to(c_out, _sublane_pack(out_itemsize))
    # Bytes per lane of the double-buffered in+out tiles (sublane padded),
    # plus an f32 accumulator temp when the output dtype is narrower than f32.
    per_lane = 2 * c_in_pad * in_itemsize + 2 * c_out_pad * out_itemsize
    if out_itemsize < 4:
        per_lane += c_out_pad * 4
    vmem_cap = max(128, (vmem_budget_bytes // per_lane // 128) * 128)
    # Pipelining floor: keep >= target_steps grid steps in total.
    tiles_per_batch = -(-target_steps // batch)          # ceil
    pipeline_cap = max(128, (n // tiles_per_batch // 128) * 128)
    tile = min(vmem_cap, pipeline_cap, (n // 128) * 128)
    if n % 128 == 0:
        # Prefer a tile that divides n exactly (no ragged/masked tail block);
        # 128 always divides n here, so this loop terminates.
        while tile > 128 and n % tile != 0:
            tile -= 128
    return tile


def _vmem_limit_bytes(tn, c_in, c_out, in_itemsize, out_itemsize):
    """Explicit scoped-VMEM limit: padded double-buffered working set + headroom."""
    c_in_pad = _pad_to(c_in, _sublane_pack(in_itemsize))
    c_out_pad = _pad_to(c_out, _sublane_pack(out_itemsize))
    ws = 2 * c_in_pad * tn * in_itemsize                     # input tiles (x2)
    ws += 2 * c_out_pad * tn * out_itemsize                  # output tiles (x2)
    ws += 2 * c_out_pad * _pad_to(c_in, 128) * in_itemsize   # resident weight
    ws += 2 * c_out_pad * 128 * in_itemsize                  # resident bias
    if out_itemsize < 4:
        ws += c_out_pad * tn * 4                             # f32 accumulator temp
    # ~50% headroom + 1 MiB for Mosaic internal scratch; floor at 8 MiB (safe
    # under v5e's 16 MiB scoped default), cap well under v7x's 64 MiB physical.
    return int(min(max(ws * 3 // 2 + (1 << 20), 8 << 20), 48 << 20))


@jax.jit
def linear_mapping_layer(x, weight, bias):
    """Forward pass of LinearMappingLayer (1x1x1 Conv3d).

    Args:
      x:      (B, C_in, T, H, W) float32, NCTHW (PyTorch convention).
      weight: (C_out, C_in, 1, 1, 1) float32 (PyTorch Conv3d weight shape).
      bias:   (C_out,) float32.
    Returns:
      (B, C_out, T, H, W) float32.
    """
    B, C_in, T, H, W = x.shape
    C_out = weight.shape[0]
    N = T * H * W

    # Free reshapes only (contiguous trailing-dim collapse): no transposes,
    # no padding copy of the activation.
    xm = x.reshape(B, C_in, N)          # (B, C_in, N): spatial axis on lanes
    w = weight.reshape(C_out, C_in)     # (C_out, C_in)
    bb = bias.reshape(C_out, 1)         # (C_out, 1)

    in_isz = x.dtype.itemsize
    out_dtype = x.dtype
    out_isz = jnp.dtype(out_dtype).itemsize

    tn = _pick_spatial_tile(N, B, C_in, C_out, in_isz, out_isz,
                            _default_vmem_budget_bytes())
    num_tiles = pl.cdiv(N, tn)

    # Advisory cost hint: this custom call is bandwidth-bound.
    cost = pl.CostEstimate(
        flops=2 * B * N * C_in * C_out,
        transcendentals=0,
        bytes_accessed=(C_in + C_out) * B * N * in_isz
        + C_out * C_in * in_isz + C_out * in_isz,
    )

    out = pl.pallas_call(
        _conv1x1_kernel,
        out_shape=jax.ShapeDtypeStruct((B, C_out, N), out_dtype),
        grid_spec=pltpu.PrefetchScalarGridSpec(
            num_scalar_prefetch=0,
            # Spatial-tile axis OUTERMOST: it is the plentiful axis, so the
            # v7x megacore split lands on it (balanced even for B == 1).
            grid=(num_tiles, B),
            in_specs=[
                # Batch dim squeezed (None); spatial tile is lane-dense.
                pl.BlockSpec((None, C_in, tn), lambda j, b: (b, 0, j)),
                # Weight / bias resident across the whole grid.
                pl.BlockSpec((C_out, C_in), lambda j, b: (0, 0)),
                pl.BlockSpec((C_out, 1), lambda j, b: (0, 0)),
            ],
            out_specs=pl.BlockSpec((None, C_out, tn), lambda j, b: (b, 0, j)),
        ),
        compiler_params=pltpu.CompilerParams(
            dimension_semantics=("parallel", "parallel"),
            vmem_limit_bytes=_vmem_limit_bytes(tn, C_in, C_out, in_isz, out_isz),
        ),
        cost_estimate=cost,
    )(xm, w, bb)

    # Free reshape back to NCTHW.
    return out.reshape(B, C_out, T, H, W)


if __name__ == "__main__":
    # Small shapes consistent with the module: B=2, C_in=4, T=4, H=8, W=8, C_out=8.
    key = jax.random.PRNGKey(0)
    kx, kw, kb = jax.random.split(key, 3)

    B, C_in, T, H, W = 2, 4, 4, 8, 8
    C_out = 8

    x = jax.random.normal(kx, (B, C_in, T, H, W), dtype=jnp.float32)
    # Deterministic synthetic parameters (Conv3d weight shape: (C_out, C_in, 1, 1, 1)).
    weight = jax.random.normal(kw, (C_out, C_in, 1, 1, 1), dtype=jnp.float32) * 0.1
    bias = jax.random.normal(kb, (C_out,), dtype=jnp.float32) * 0.1

    out = linear_mapping_layer(x, weight, bias)
    out = jax.block_until_ready(out)

    # Pure-JAX reference (1x1x1 conv == channel-wise linear map), same precision.
    ref = jnp.einsum(
        "bcthw,oc->bothw", x, weight.reshape(C_out, C_in),
        precision=jax.lax.Precision.HIGHEST,
    ) + bias.reshape(1, C_out, 1, 1, 1)
    assert out.shape == (B, C_out, T, H, W)
    assert jnp.allclose(out, ref, atol=1e-4, rtol=1e-4)

    print("KERNEL_OK")
</pallas_src>

<mosaic_0001>
module attributes {stable_mosaic.version = 11 : i64} {
  func.func @_conv1x1_kernel(%arg0: i32, %arg1: i32, %arg2: memref<1x4x128xf32, #tpu.memory_space<vmem>>, %arg3: memref<8x4xf32, #tpu.memory_space<vmem>>, %arg4: memref<8x1xf32, #tpu.memory_space<vmem>>, %arg5: memref<1x8x128xf32, #tpu.memory_space<vmem>>) attributes {dimension_semantics = [#tpu.dimension_semantics<parallel>, #tpu.dimension_semantics<parallel>], iteration_bounds = array<i64: 2, 2>, scalar_prefetch = 0 : i64, scratch_operands = 0 : i64, tpu.core_type = #tpu.core_type<tc>, window_params = [{transform_indices = @transform_0, window_bounds = array<i64: 1, 4, 128>}, {pipeline_mode = #tpu.pipeline_mode<synchronous>, transform_indices = @transform_1, window_bounds = array<i64: 8, 4>}, {pipeline_mode = #tpu.pipeline_mode<synchronous>, transform_indices = @transform_2, window_bounds = array<i64: 8, 1>}, {transform_indices = @transform_3, window_bounds = array<i64: 1, 8, 128>}]} {
    %c0 = arith.constant 0 : index
    %c0_0 = arith.constant 0 : index
    %0 = vector.load %arg3[%c0, %c0_0] : memref<8x4xf32, #tpu.memory_space<vmem>>, vector<8x4xf32>
    %c0_1 = arith.constant 0 : index
    %c0_2 = arith.constant 0 : index
    %c0_3 = arith.constant 0 : index
    %1 = vector.load %arg2[%c0_1, %c0_2, %c0_3] : memref<1x4x128xf32, #tpu.memory_space<vmem>>, vector<1x4x128xf32>
    %2 = vector.shape_cast %1 : vector<1x4x128xf32> to vector<4x128xf32>
    %cst = arith.constant dense<0.000000e+00> : vector<8x128xf32>
    %3 = tpu.matmul %0, %2, %cst {dimension_numbers = #tpu.dot_dimension_numbers<[1], [0], [0], [1], [0, 0, 1, 1], [], []>, precision = #tpu.contract_precision<fp32>} : vector<8x4xf32>, vector<4x128xf32>, vector<8x128xf32> -> vector<8x128xf32>
    %c0_4 = arith.constant 0 : index
    %c0_5 = arith.constant 0 : index
    %4 = vector.load %arg4[%c0_4, %c0_5] : memref<8x1xf32, #tpu.memory_space<vmem>>, vector<8x1xf32>
    %5 = vector.broadcast %4 : vector<8x1xf32> to vector<8x128xf32>
    %6 = arith.addf %3, %5 : vector<8x128xf32>
    %c0_6 = arith.constant 0 : index
    %c0_7 = arith.constant 0 : index
    %c0_8 = arith.constant 0 : index
    %7 = vector.load %arg5[%c0_6, %c0_7, %c0_8] : memref<1x8x128xf32, #tpu.memory_space<vmem>>, vector<1x8x128xf32>
    %8 = vector.shape_cast %7 : vector<1x8x128xf32> to vector<8x128xf32>
    %9 = vector.shape_cast %6 : vector<8x128xf32> to vector<1x8x128xf32>
    tpu.vector_store %arg5[%c0_6, %c0_7, %c0_8], %9 {strides = array<i32>} : memref<1x8x128xf32, #tpu.memory_space<vmem>>, vector<1x8x128xf32>,
    return
  }
  func.func @transform_0(%arg0: i32, %arg1: i32) -> (i32, i32, i32) {
    %c0_i32 = arith.constant 0 : i32
    %c0_i32_0 = arith.constant 0 : i32
    return %arg1, %c0_i32, %arg0 : i32, i32, i32
  }
  func.func @transform_1(%arg0: i32, %arg1: i32) -> (i32, i32) {
    %c0_i32 = arith.constant 0 : i32
    %c0_i32_0 = arith.constant 0 : i32
    %c0_i32_1 = arith.constant 0 : i32
    return %c0_i32, %c0_i32_0 : i32, i32
  }
  func.func @transform_2(%arg0: i32, %arg1: i32) -> (i32, i32) {
    %c0_i32 = arith.constant 0 : i32
    %c0_i32_0 = arith.constant 0 : i32
    %c0_i32_1 = arith.constant 0 : i32
    return %c0_i32, %c0_i32_0 : i32, i32
  }
  func.func @transform_3(%arg0: i32, %arg1: i32) -> (i32, i32, i32) {
    %c0_i32 = arith.constant 0 : i32
    %c0_i32_0 = arith.constant 0 : i32
    return %arg1, %c0_i32, %arg0 : i32, i32, i32
  }
}

</mosaic_0001>

<llo_original>
// kernel: linear_mapping_layer.1
$region0: #{linear_mapping_layer.1}
  #allocation0 [shape = 'u32[]', space=smem, size = 0x4, offset = 0x4, fixed_abs, tag = 'smem constant byte address 0x4 - core index']
  #allocation1 [shape = 'u32[144,128]{1,0:T(1,128)}', space=vmem, size = 0x12000, scoped, tag = 'internal scratch']
  %s0 = inlined_call_operand.vmem [shape: f32[2,4,256], index: 0, kind: input, shape index: {}]
  %s1 = inlined_call_operand.vmem [shape: f32[8,4], index: 1, kind: input, shape index: {}]
  %s2 = inlined_call_operand.vmem [shape: f32[8,1], index: 2, kind: input, shape index: {}]
  %s3 = inlined_call_operand.vmem [shape: f32[2,8,256], index: 3, kind: output, shape index: {}]
  %s4 = sld [smem:[#allocation0]]
  $region45: #{linear_mapping_layer.1} parent=0
    _
  %s6 = ssub.s32 1, %s4
  %s7 = scalar_select 0, %s6, %s4
  loop: start=0, step=1, limit=6
  $region2: #{linear_mapping_layer.1} parent=0 // loop_pre_header
    _
  $region3: #{linear_mapping_layer.1} parent=0 // loop_header
    %s9 = sphi 0, %s13
    %p10 = scmp.ge.s32.totalorder %s9, 6
    %s16 = sphi 0, %s28
    %s17 = sphi 0, %s24
    %s18 = sphi 0, %s16
    %s19 = sphi 0, %s17
    %s20 = sphi 0, %s18
    %s21 = sphi 0, %s19
    %s33 = sphi 0, %s35
    %s36 = sphi 0, %s33
    %s37 = sphi 0, %s36
    %s53 = sphi 0, %s37
    %s57 = sphi 0, %s57
    %s59 = sphi 0, %s57
    %s60 = sphi 0, %s59
    %s74 = sphi 0, %s60
    %s78 = sphi 0, %s78
    %s80 = sphi 0, %s78
    %s81 = sphi 0, %s80
    %s95 = sphi 0, %s81
    %s103 = sphi 0, %s105
    %s106 = sphi 0, %s103
    %s107 = sphi 0, %s106
    %s123 = sphi 0, %s107
  $region4: #{linear_mapping_layer.1} parent=0 // loop_header_branch
    %12 = sbr.rel (%p10) target = $region8
  $region5: #{linear_mapping_layer.1} parent=0 // loop_body
    %s14 = ssub.s32 %s9, 1
    %s15 = ssub.s32 %s9, 2
    %s22 = sadd.s32 1, %s17
    %p23 = scmp.ge.s32.totalorder %s22, 2
    %s24 = scalar_select %p23, 0, %s22
    %s25 = sadd.s32 1, %s16
    %s26 = scalar_select %p23, %s25, %s16
    %p27 = scmp.ge.s32.totalorder %s26, 2
    %s28 = scalar_select %p27, 0, %s26
    %s29 = ssub.s32 %s17, %s24
    %s30 = ssub.s32 %s16, %s28
    %s31 = sor.u32 %s29, %s30
    %p32 = scmp.eq.s32.totalorder %s31, 0
    %s34 = sadd.s32 %s33, 1
    %s35 = scalar_select %p32, %s33, %s34
    %p38 = pneg %p32
    %p39 = scmp.eq.s32.totalorder %s9, 3
    %p40 = por %p38, %p39
    %p41 = scmp.ne.s32.totalorder %s33, %s36
    %p42 = scmp.eq.s32.totalorder %s9, 0
    %p43 = por %p41, %p42
    %p44 = scmp.ne.s32.totalorder %s33, %s36
    %p45 = scmp.eq.s32.totalorder %s14, 3
    %p46 = por %p44, %p45
    %p47 = scmp.ne.s32.totalorder %s36, %s37
    %p48 = scmp.eq.s32.totalorder %s14, 0
    %p49 = por %p47, %p48
    %p50 = scmp.ne.s32.totalorder %s36, %s37
    %p51 = scmp.eq.s32.totalorder %s15, 3
    %p52 = por %p50, %p51
    %p54 = scmp.ne.s32.totalorder %s37, %s53
    %p55 = scmp.eq.s32.totalorder %s15, 0
    %p56 = por %p54, %p55
    %s58 = sadd.s32 %s57, 1
    %p61 = scmp.eq.s32.totalorder %s9, 3
    %p62 = scmp.ne.s32.totalorder %s57, %s59
    %p63 = scmp.eq.s32.totalorder %s9, 0
    %p64 = por %p62, %p63
    %p65 = scmp.ne.s32.totalorder %s57, %s59
    %p66 = scmp.eq.s32.totalorder %s14, 3
    %p67 = por %p65, %p66
    %p68 = scmp.ne.s32.totalorder %s59, %s60
    %p69 = scmp.eq.s32.totalorder %s14, 0
    %p70 = por %p68, %p69
    %p71 = scmp.ne.s32.totalorder %s59, %s60
    %p72 = scmp.eq.s32.totalorder %s15, 3
    %p73 = por %p71, %p72
    %p75 = scmp.ne.s32.totalorder %s60, %s74
    %p76 = scmp.eq.s32.totalorder %s15, 0
    %p77 = por %p75, %p76
    %s79 = sadd.s32 %s78, 1
    %p82 = scmp.eq.s32.totalorder %s9, 3
    %p83 = scmp.ne.s32.totalorder %s78, %s80
    %p84 = scmp.eq.s32.totalorder %s9, 0
    %p85 = por %p83, %p84
    %p86 = scmp.ne.s32.totalorder %s78, %s80
    %p87 = scmp.eq.s32.totalorder %s14, 3
    %p88 = por %p86, %p87
    %p89 = scmp.ne.s32.totalorder %s80, %s81
    %p90 = scmp.eq.s32.totalorder %s14, 0
    %p91 = por %p89, %p90
    %p92 = scmp.ne.s32.totalorder %s80, %s81
    %p93 = scmp.eq.s32.totalorder %s15, 3
    %p94 = por %p92, %p93
    %p96 = scmp.ne.s32.totalorder %s81, %s95
    %p97 = scmp.eq.s32.totalorder %s15, 0
    %p98 = por %p96, %p97
    %s99 = ssub.s32 %s17, %s24
    %s100 = ssub.s32 %s16, %s28
    %s101 = sor.u32 %s99, %s100
    %p102 = scmp.eq.s32.totalorder %s101, 0
    %s104 = sadd.s32 %s103, 1
    %s105 = scalar_select %p102, %s103, %s104
    %p108 = pneg %p102
    %p109 = scmp.eq.s32.totalorder %s9, 3
    %p110 = por %p108, %p109
    %p111 = scmp.ne.s32.totalorder %s103, %s106
    %p112 = scmp.eq.s32.totalorder %s9, 0
    %p113 = por %p111, %p112
    %p114 = scmp.ne.s32.totalorder %s103, %s106
    %p115 = scmp.eq.s32.totalorder %s14, 3
    %p116 = por %p114, %p115
    %p117 = scmp.ne.s32.totalorder %s106, %s107
    %p118 = scmp.eq.s32.totalorder %s14, 0
    %p119 = por %p117, %p118
    %p120 = scmp.ne.s32.totalorder %s106, %s107
    %p121 = scmp.eq.s32.totalorder %s15, 3
    %p122 = por %p120, %p121
    %p124 = scmp.ne.s32.totalorder %s107, %s123
    %p125 = scmp.eq.s32.totalorder %s15, 0
    %p126 = por %p124, %p125
    %p127 = scmp.le.s32.totalorder 1, %s9
    %p128 = scmp.lt.s32.totalorder %s9, 5
    %p129 = pnand %p127, %p128
    %p130 = pneg %p129
    // Predicated region
    $region9: #{linear_mapping_layer.1} parent=5 // pred_check
      _
    $region10: #{linear_mapping_layer.1} parent=5 // pred_check_branch
      %132 = sbr.rel (%p129) target = $region12
    $region11: #{linear_mapping_layer.1} parent=5 // pred_region
      %s133 = ssub.s32 %s9, 1
      // Predicated region
      $region13: #{linear_mapping_layer.1} parent=11 // pred_check
        %p134 = pneg %p70
      $region14: #{linear_mapping_layer.1} parent=11 // pred_check_branch
        %136 = sbr.rel (%p134) target = $region16
      $region15: #{linear_mapping_layer.1} parent=11 // pred_region
        _
      $region16: #{linear_mapping_layer.1} parent=11 // pred_fallthru
        _
      // Predicated region
      $region17: #{linear_mapping_layer.1} parent=11 // pred_check
        %p137 = pneg %p91
      $region18: #{linear_mapping_layer.1} parent=11 // pred_check_branch
        %139 = sbr.rel (%p137) target = $region20
      $region19: #{linear_mapping_layer.1} parent=11 // pred_region
        _
      $region20: #{linear_mapping_layer.1} parent=11 // pred_fallthru
        _
    $region12: #{linear_mapping_layer.1} parent=5 // pred_fallthru
      _
    %p140 = scmp.lt.s32.totalorder %s9, 4
    // Predicated region
    $region21: #{linear_mapping_layer.1} parent=5 // pred_check
      %p141 = pneg %p140
    $region22: #{linear_mapping_layer.1} parent=5 // pred_check_branch
      %143 = sbr.rel (%p141) target = $region24
    $region23: #{linear_mapping_layer.1} parent=5 // pred_region
      // Predicated region
      $region25: #{linear_mapping_layer.1} parent=23 // pred_check
        %p144 = pneg %p43
      $region26: #{linear_mapping_layer.1} parent=23 // pred_check_branch
        %146 = sbr.rel (%p144) target = $region28
      $region27: #{linear_mapping_layer.1} parent=23 // pred_region
        %p147 = scmp.lt.s32.totalorder %s17, 1
        %s148 = scalar_select %p147, %s17, 1
        %p149 = scmp.lt.s32.totalorder %s16, 1
        %s150 = scalar_select %p149, %s16, 1
        %s151 = smul.addr %s148, 2
        %s152 = sadd.s32 %s150, %s151
        %s153 = smul.addr %s152, 4
        %s154 = scalar_lea.vmem %s0, %s153
      $region28: #{linear_mapping_layer.1} parent=23 // pred_fallthru
        _
    $region24: #{linear_mapping_layer.1} parent=5 // pred_fallthru
      _
    %p155 = scmp.le.s32.totalorder 1, %s9
    %p156 = scmp.lt.s32.totalorder %s9, 5
    %p157 = pnand %p155, %p156
    %p158 = pneg %p157
    // Predicated region
    $region29: #{linear_mapping_layer.1} parent=5 // pred_check
      _
    $region30: #{linear_mapping_layer.1} parent=5 // pred_check_branch
      %160 = sbr.rel (%p157) target = $region32
    $region31: #{linear_mapping_layer.1} parent=5 // pred_region
      %s161 = ssub.s32 %s9, 1
      %p162 = scmp.lt.s32.totalorder %s19, 1
      %s163 = scalar_select %p162, %s19, 1
      %p164 = scmp.lt.s32.totalorder %s18, 1
      %s165 = scalar_select %p164, %s18, 1
      %s166 = smul.addr %s163, 2
      %s167 = sadd.s32 %s165, %s166
      %s168 = smul.addr %s167, 4
      %s169 = scalar_lea.vmem %s0, %s168
      %p170 = pneg %p49
      %p171 = pneg %p46
      %p172 = pneg %p70
      %p173 = pneg %p67
      %p174 = pneg %p91
      %p175 = pneg %p88
      %p176 = pneg %p119
      %p177 = pneg %p116
      %p178 = scmp.lt.s32.totalorder %s19, 1
      %s179 = scalar_select %p178, %s19, 1
      %p180 = scmp.lt.s32.totalorder %s18, 1
      %s181 = scalar_select %p180, %s18, 1
      %s182 = smul.addr %s179, 2
      %s183 = sadd.s32 %s181, %s182
      %s184 = smul.addr %s183, 8
      %s185 = scalar_lea.vmem %s3, %s184
      %p186 = scmp.lt.s32.totalorder %s19, 1
      %s187 = scalar_select %p186, %s19, 1
      %p188 = scmp.lt.s32.totalorder %s18, 1
      %s189 = scalar_select %p188, %s18, 1
      %s190 = smul.addr %s187, 2
      %s191 = sadd.s32 %s189, %s190
      %s192 = smul.addr %s191, 4
      %s193 = scalar_lea.vmem %s0, %s192
      %p194 = scmp.lt.s32.totalorder %s19, 1
      %s195 = scalar_select %p194, %s19, 1
      %p196 = scmp.lt.s32.totalorder %s18, 1
      %s197 = scalar_select %p196, %s18, 1
      %s198 = smul.addr %s195, 2
      %s199 = sadd.s32 %s197, %s198
      %s200 = smul.addr %s199, 8
      %s201 = scalar_lea.vmem %s3, %s200
      %v202 = vld [vmem:[%s1] sm:$0xff]
      %v203 = vld [vmem:[%s193] sm:$0xf]
      %v204 = vld [vmem:[%s2] sm:$0xff]
      %206 = vset.pattern.permute.xlu0 0
      %207 = vperm.xlu0 %206, %v204
      %v208 = vpop.permute.xlu0 %207
      %vm210 = vcmask 31744
      %v212 = vsel %vm210, %v202, 0
      %vm214 = vcmask 1043456
      %v216 = vsel %vm214, %v203, 0
      %218 = vmatprep.subr.mxu0 0.0
      %219 = vmatpush1.msra.mxu0 0.0
      %220 = vmatprep.subr.mxu0 0.0
      %221 = vmatpush1.msra.mxu0 0.0
      %222 = vmatprep.subr.mxu0 0.0
      %223 = vmatpush1.msra.mxu0 0.0
      %224 = vmatprep.subr.mxu0 0.0
      %225 = vmatpush1.msra.mxu0 0.0
      %226 = vmatprep.subr.mxu0 0.0
      %227 = vmatpush1.msra.mxu0 0.0
      %228 = vmatprep.subr.mxu0 0.0
      %229 = vmatpush1.msra.mxu0 0.0
      %230 = vmatprep.subr.mxu0 0.0
      %231 = vmatpush1.msra.mxu0 0.0
      %232 = vmatprep.subr.mxu0 0.0
      %233 = vmatpush1.msra.mxu0 0.0
      %234 = vmatprep.subr.mxu0 0.0
      %235 = vmatpush1.msra.mxu0 0.0
      %236 = vmatprep.subr.mxu0 0.0
      %237 = vmatpush1.msra.mxu0 0.0
      %238 = vmatprep.subr.mxu0 0.0
      %239 = vmatpush1.msra.mxu0 0.0
      %240 = vmatprep.subr.mxu0 0.0
      %241 = vmatpush1.msra.mxu0 0.0
      %242 = vmatprep.subr.mxu0 0.0
      %243 = vmatpush1.msra.mxu0 0.0
      %244 = vmatprep.subr.mxu0 0.0
      %245 = vmatpush1.msra.mxu0 0.0
      %246 = vmatprep.subr.mxu0 0.0
      %247 = vmatpush1.msra.mxu0 0.0
      %248 = vmatprep.subr.mxu0 0.0
      %v249 = vand.u32 %v216, 4294901760
      %250 = vmatpush1.msra.mxu0 %v249
      %251 = vmatprep.subr.mxu0 0.0
      %252 = vmatpush2.msra.mxu0 0.0
      %253 = vmatprep.subr.mxu0 0.0
      %254 = vmatpush2.msra.mxu0 0.0
      %255 = vmatprep.subr.mxu0 0.0
      %256 = vmatpush2.msra.mxu0 0.0
      %257 = vmatprep.subr.mxu0 0.0
      %258 = vmatpush2.msra.mxu0 0.0
      %259 = vmatprep.subr.mxu0 0.0
      %260 = vmatpush2.msra.mxu0 0.0
      %261 = vmatprep.subr.mxu0 0.0
      %262 = vmatpush2.msra.mxu0 0.0
      %263 = vmatprep.subr.mxu0 0.0
      %264 = vmatpush2.msra.mxu0 0.0
      %265 = vmatprep.subr.mxu0 0.0
      %266 = vmatpush2.msra.mxu0 0.0
      %267 = vmatprep.subr.mxu0 0.0
      %268 = vmatpush2.msra.mxu0 0.0
      %269 = vmatprep.subr.mxu0 0.0
      %270 = vmatpush2.msra.mxu0 0.0
      %271 = vmatprep.subr.mxu0 0.0
      %272 = vmatpush2.msra.mxu0 0.0
      %273 = vmatprep.subr.mxu0 0.0
      %274 = vmatpush2.msra.mxu0 0.0
      %275 = vmatprep.subr.mxu0 0.0
      %276 = vmatpush2.msra.mxu0 0.0
      %277 = vmatprep.subr.mxu0 0.0
      %278 = vmatpush2.msra.mxu0 0.0
      %279 = vmatprep.subr.mxu0 0.0
      %280 = vmatpush2.msra.mxu0 0.0
      %281 = vmatprep.subr.mxu0 0.0
      %282 = vmatpush2.msra.mxu0 0.0
      %283 = vmatprep.mubr.f32.mxu0 0.0
      %v284 = vand.u32 %v212, 4294901760
      %v285 = vsub.f32 %v212, %v284
      %v286 = vand.u32 %v285, 4294901760
      %v287 = vsub.f32 %v285, %v286
      %v288 = vand.u32 %v287, 4294901760
      %289 = vmatmul.mubr.f32.gmra.mxu0 %v288
      %v290 = vpop.f32.mrf.mxu0
      %v291 = vadd.f32 %v208, %v290
      %v292 = vpop.f32.mrf.mxu0
      %293 = vdwg.mxu0
      %294 = vmatprep.subr.mxu0 0.0
      %295 = vmatpush1.msra.mxu0 0.0
      %296 = vmatprep.subr.mxu0 0.0
      %297 = vmatpush1.msra.mxu0 0.0
      %298 = vmatprep.subr.mxu0 0.0
      %299 = vmatpush1.msra.mxu0 0.0
      %300 = vmatprep.subr.mxu0 0.0
      %301 = vmatpush1.msra.mxu0 0.0
      %302 = vmatprep.subr.mxu0 0.0
      %303 = vmatpush1.msra.mxu0 0.0
      %304 = vmatprep.subr.mxu0 0.0
      %305 = vmatpush1.msra.mxu0 0.0
      %306 = vmatprep.subr.mxu0 0.0
      %307 = vmatpush1.msra.mxu0 0.0
      %308 = vmatprep.subr.mxu0 0.0
      %309 = vmatpush1.msra.mxu0 0.0
      %310 = vmatprep.subr.mxu0 0.0
      %311 = vmatpush1.msra.mxu0 0.0
      %312 = vmatprep.subr.mxu0 0.0
      %313 = vmatpush1.msra.mxu0 0.0
      %314 = vmatprep.subr.mxu0 0.0
      %315 = vmatpush1.msra.mxu0 0.0
      %316 = vmatprep.subr.mxu0 0.0
      %317 = vmatpush1.msra.mxu0 0.0
      %318 = vmatprep.subr.mxu0 0.0
      %319 = vmatpush1.msra.mxu0 0.0
      %320 = vmatprep.subr.mxu0 0.0
      %321 = vmatpush1.msra.mxu0 0.0
      %322 = vmatprep.subr.mxu0 0.0
      %323 = vmatpush1.msra.mxu0 0.0
      %324 = vmatprep.subr.mxu0 0.0
      %v325 = vand.u32 %v216, 4294901760
      %v326 = vsub.f32 %v216, %v325
      %v327 = vand.u32 %v326, 4294901760
      %v328 = vsub.f32 %v326, %v327
      %v329 = vand.u32 %v328, 4294901760
      %330 = vmatpush1.msra.mxu0 %v329
      %331 = vmatprep.subr.mxu0 0.0
      %332 = vmatpush2.msra.mxu0 0.0
      %333 = vmatprep.subr.mxu0 0.0
      %334 = vmatpush2.msra.mxu0 0.0
      %335 = vmatprep.subr.mxu0 0.0
      %336 = vmatpush2.msra.mxu0 0.0
      %337 = vmatprep.subr.mxu0 0.0
      %338 = vmatpush2.msra.mxu0 0.0
      %339 = vmatprep.subr.mxu0 0.0
      %340 = vmatpush2.msra.mxu0 0.0
      %341 = vmatprep.subr.mxu0 0.0
      %342 = vmatpush2.msra.mxu0 0.0
      %343 = vmatprep.subr.mxu0 0.0
      %344 = vmatpush2.msra.mxu0 0.0
      %345 = vmatprep.subr.mxu0 0.0
      %346 = vmatpush2.msra.mxu0 0.0
      %347 = vmatprep.subr.mxu0 0.0
      %348 = vmatpush2.msra.mxu0 0.0
      %349 = vmatprep.subr.mxu0 0.0
      %350 = vmatpush2.msra.mxu0 0.0
      %351 = vmatprep.subr.mxu0 0.0
      %352 = vmatpush2.msra.mxu0 0.0
      %353 = vmatprep.subr.mxu0 0.0
      %354 = vmatpush2.msra.mxu0 0.0
      %355 = vmatprep.subr.mxu0 0.0
      %356 = vmatpush2.msra.mxu0 0.0
      %357 = vmatprep.subr.mxu0 0.0
      %358 = vmatpush2.msra.mxu0 0.0
      %359 = vmatprep.subr.mxu0 0.0
      %360 = vmatpush2.msra.mxu0 0.0
      %361 = vmatprep.subr.mxu0 0.0
      %362 = vmatpush2.msra.mxu0 0.0
      %363 = vmatprep.mubr.f32.mxu0 0.0
      %v364 = vand.u32 %v212, 4294901760
      %365 = vmatmul.mubr.f32.gmra.mxu0 %v364
      %v366 = vpop.f32.mrf.mxu0
      %v367 = vadd.f32 %v291, %v366
      %v368 = vpop.f32.mrf.mxu0
      %369 = vdwg.mxu0
      %370 = vmatprep.subr.mxu0 0.0
      %371 = vmatpush1.msra.mxu0 0.0
      %372 = vmatprep.subr.mxu0 0.0
      %373 = vmatpush1.msra.mxu0 0.0
      %374 = vmatprep.subr.mxu0 0.0
      %375 = vmatpush1.msra.mxu0 0.0
      %376 = vmatprep.subr.mxu0 0.0
      %377 = vmatpush1.msra.mxu0 0.0
      %378 = vmatprep.subr.mxu0 0.0
      %379 = vmatpush1.msra.mxu0 0.0
      %380 = vmatprep.subr.mxu0 0.0
      %381 = vmatpush1.msra.mxu0 0.0
      %382 = vmatprep.subr.mxu0 0.0
      %383 = vmatpush1.msra.mxu0 0.0
      %384 = vmatprep.subr.mxu0 0.0
      %385 = vmatpush1.msra.mxu0 0.0
      %386 = vmatprep.subr.mxu0 0.0
      %387 = vmatpush1.msra.mxu0 0.0
      %388 = vmatprep.subr.mxu0 0.0
      %389 = vmatpush1.msra.mxu0 0.0
      %390 = vmatprep.subr.mxu0 0.0
      %391 = vmatpush1.msra.mxu0 0.0
      %392 = vmatprep.subr.mxu0 0.0
      %393 = vmatpush1.msra.mxu0 0.0
      %394 = vmatprep.subr.mxu0 0.0
      %395 = vmatpush1.msra.mxu0 0.0
      %396 = vmatprep.subr.mxu0 0.0
      %397 = vmatpush1.msra.mxu0 0.0
      %398 = vmatprep.subr.mxu0 0.0
      %399 = vmatpush1.msra.mxu0 0.0
      %400 = vmatprep.subr.mxu0 0.0
      %v401 = vand.u32 %v216, 4294901760
      %v402 = vsub.f32 %v216, %v401
      %403 = vmatpush1.msra.mxu0 %v402
      %404 = vmatprep.subr.mxu0 0.0
      %405 = vmatpush2.msra.mxu0 0.0
      %406 = vmatprep.subr.mxu0 0.0
      %407 = vmatpush2.msra.mxu0 0.0
      %408 = vmatprep.subr.mxu0 0.0
      %409 = vmatpush2.msra.mxu0 0.0
      %410 = vmatprep.subr.mxu0 0.0
      %411 = vmatpush2.msra.mxu0 0.0
      %412 = vmatprep.subr.mxu0 0.0
      %413 = vmatpush2.msra.mxu0 0.0
      %414 = vmatprep.subr.mxu0 0.0
      %415 = vmatpush2.msra.mxu0 0.0
      %416 = vmatprep.subr.mxu0 0.0
      %417 = vmatpush2.msra.mxu0 0.0
      %418 = vmatprep.subr.mxu0 0.0
      %419 = vmatpush2.msra.mxu0 0.0
      %420 = vmatprep.subr.mxu0 0.0
      %421 = vmatpush2.msra.mxu0 0.0
      %422 = vmatprep.subr.mxu0 0.0
      %423 = vmatpush2.msra.mxu0 0.0
      %424 = vmatprep.subr.mxu0 0.0
      %425 = vmatpush2.msra.mxu0 0.0
      %426 = vmatprep.subr.mxu0 0.0
      %427 = vmatpush2.msra.mxu0 0.0
      %428 = vmatprep.subr.mxu0 0.0
      %429 = vmatpush2.msra.mxu0 0.0
      %430 = vmatprep.subr.mxu0 0.0
      %431 = vmatpush2.msra.mxu0 0.0
      %432 = vmatprep.subr.mxu0 0.0
      %433 = vmatpush2.msra.mxu0 0.0
      %434 = vmatprep.subr.mxu0 0.0
      %435 = vmatpush2.msra.mxu0 0.0
      %436 = vmatprep.mubr.f32.mxu0 0.0
      %v437 = vand.u32 %v212, 4294901760
      %v438 = vsub.f32 %v212, %v437
      %439 = vmatmul.mubr.f32.gmra.mxu0 %v438
      %v440 = vpop.f32.mrf.mxu0
      %v441 = vadd.f32 %v367, %v440
      %v442 = vpop.f32.mrf.mxu0
      %443 = vdwg.mxu0
      %444 = vmatprep.subr.mxu0 0.0
      %445 = vmatpush1.msra.mxu0 0.0
      %446 = vmatprep.subr.mxu0 0.0
      %447 = vmatpush1.msra.mxu0 0.0
      %448 = vmatprep.subr.mxu0 0.0
      %449 = vmatpush1.msra.mxu0 0.0
      %450 = vmatprep.subr.mxu0 0.0
      %451 = vmatpush1.msra.mxu0 0.0
      %452 = vmatprep.subr.mxu0 0.0
      %453 = vmatpush1.msra.mxu0 0.0
      %454 = vmatprep.subr.mxu0 0.0
      %455 = vmatpush1.msra.mxu0 0.0
      %456 = vmatprep.subr.mxu0 0.0
      %457 = vmatpush1.msra.mxu0 0.0
      %458 = vmatprep.subr.mxu0 0.0
      %459 = vmatpush1.msra.mxu0 0.0
      %460 = vmatprep.subr.mxu0 0.0
      %461 = vmatpush1.msra.mxu0 0.0
      %462 = vmatprep.subr.mxu0 0.0
      %463 = vmatpush1.msra.mxu0 0.0
      %464 = vmatprep.subr.mxu0 0.0
      %465 = vmatpush1.msra.mxu0 0.0
      %466 = vmatprep.subr.mxu0 0.0
      %467 = vmatpush1.msra.mxu0 0.0
      %468 = vmatprep.subr.mxu0 0.0
      %469 = vmatpush1.msra.mxu0 0.0
      %470 = vmatprep.subr.mxu0 0.0
      %471 = vmatpush1.msra.mxu0 0.0
      %472 = vmatprep.subr.mxu0 0.0
      %473 = vmatpush1.msra.mxu0 0.0
      %474 = vmatprep.subr.mxu0 0.0
      %v475 = vand.u32 %v216, 4294901760
      %476 = vmatpush1.msra.mxu0 %v475
      %477 = vmatprep.subr.mxu0 0.0
      %478 = vmatpush2.msra.mxu0 0.0
      %479 = vmatprep.subr.mxu0 0.0
      %480 = vmatpush2.msra.mxu0 0.0
      %481 = vmatprep.subr.mxu0 0.0
      %482 = vmatpush2.msra.mxu0 0.0
      %483 = vmatprep.subr.mxu0 0.0
      %484 = vmatpush2.msra.mxu0 0.0
      %485 = vmatprep.subr.mxu0 0.0
      %486 = vmatpush2.msra.mxu0 0.0
      %487 = vmatprep.subr.mxu0 0.0
      %488 = vmatpush2.msra.mxu0 0.0
      %489 = vmatprep.subr.mxu0 0.0
      %490 = vmatpush2.msra.mxu0 0.0
      %491 = vmatprep.subr.mxu0 0.0
      %492 = vmatpush2.msra.mxu0 0.0
      %493 = vmatprep.subr.mxu0 0.0
      %494 = vmatpush2.msra.mxu0 0.0
      %495 = vmatprep.subr.mxu0 0.0
      %496 = vmatpush2.msra.mxu0 0.0
      %497 = vmatprep.subr.mxu0 0.0
      %498 = vmatpush2.msra.mxu0 0.0
      %499 = vmatprep.subr.mxu0 0.0
      %500 = vmatpush2.msra.mxu0 0.0
      %501 = vmatprep.subr.mxu0 0.0
      %502 = vmatpush2.msra.mxu0 0.0
      %503 = vmatprep.subr.mxu0 0.0
      %504 = vmatpush2.msra.mxu0 0.0
      %505 = vmatprep.subr.mxu0 0.0
      %506 = vmatpush2.msra.mxu0 0.0
      %507 = vmatprep.subr.mxu0 0.0
      %508 = vmatpush2.msra.mxu0 0.0
      %509 = vmatprep.mubr.f32.mxu0 0.0
      %v510 = vand.u32 %v212, 4294901760
      %v511 = vsub.f32 %v212, %v510
      %v512 = vand.u32 %v511, 4294901760
      %513 = vmatmul.mubr.f32.gmra.mxu0 %v512
      %v514 = vpop.f32.mrf.mxu0
      %v515 = vadd.f32 %v441, %v514
      %v516 = vpop.f32.mrf.mxu0
      %517 = vdwg.mxu0
      %518 = vmatprep.subr.mxu0 0.0
      %519 = vmatpush1.msra.mxu0 0.0
      %520 = vmatprep.subr.mxu0 0.0
      %521 = vmatpush1.msra.mxu0 0.0
      %522 = vmatprep.subr.mxu0 0.0
      %523 = vmatpush1.msra.mxu0 0.0
      %524 = vmatprep.subr.mxu0 0.0
      %525 = vmatpush1.msra.mxu0 0.0
      %526 = vmatprep.subr.mxu0 0.0
      %527 = vmatpush1.msra.mxu0 0.0
      %528 = vmatprep.subr.mxu0 0.0
      %529 = vmatpush1.msra.mxu0 0.0
      %530 = vmatprep.subr.mxu0 0.0
      %531 = vmatpush1.msra.mxu0 0.0
      %532 = vmatprep.subr.mxu0 0.0
      %533 = vmatpush1.msra.mxu0 0.0
      %534 = vmatprep.subr.mxu0 0.0
      %535 = vmatpush1.msra.mxu0 0.0
      %536 = vmatprep.subr.mxu0 0.0
      %537 = vmatpush1.msra.mxu0 0.0
      %538 = vmatprep.subr.mxu0 0.0
      %539 = vmatpush1.msra.mxu0 0.0
      %540 = vmatprep.subr.mxu0 0.0
      %541 = vmatpush1.msra.mxu0 0.0
      %542 = vmatprep.subr.mxu0 0.0
      %543 = vmatpush1.msra.mxu0 0.0
      %544 = vmatprep.subr.mxu0 0.0
      %545 = vmatpush1.msra.mxu0 0.0
      %546 = vmatprep.subr.mxu0 0.0
      %547 = vmatpush1.msra.mxu0 0.0
      %548 = vmatprep.subr.mxu0 0.0
      %v549 = vand.u32 %v216, 4294901760
      %v550 = vsub.f32 %v216, %v549
      %v551 = vand.u32 %v550, 4294901760
      %552 = vmatpush1.msra.mxu0 %v551
      %553 = vmatprep.subr.mxu0 0.0
      %554 = vmatpush2.msra.mxu0 0.0
      %555 = vmatprep.subr.mxu0 0.0
      %556 = vmatpush2.msra.mxu0 0.0
      %557 = vmatprep.subr.mxu0 0.0
      %558 = vmatpush2.msra.mxu0 0.0
      %559 = vmatprep.subr.mxu0 0.0
      %560 = vmatpush2.msra.mxu0 0.0
      %561 = vmatprep.subr.mxu0 0.0
      %562 = vmatpush2.msra.mxu0 0.0
      %563 = vmatprep.subr.mxu0 0.0
      %564 = vmatpush2.msra.mxu0 0.0
      %565 = vmatprep.subr.mxu0 0.0
      %566 = vmatpush2.msra.mxu0 0.0
      %567 = vmatprep.subr.mxu0 0.0
      %568 = vmatpush2.msra.mxu0 0.0
      %569 = vmatprep.subr.mxu0 0.0
      %570 = vmatpush2.msra.mxu0 0.0
      %571 = vmatprep.subr.mxu0 0.0
      %572 = vmatpush2.msra.mxu0 0.0
      %573 = vmatprep.subr.mxu0 0.0
      %574 = vmatpush2.msra.mxu0 0.0
      %575 = vmatprep.subr.mxu0 0.0
      %576 = vmatpush2.msra.mxu0 0.0
      %577 = vmatprep.subr.mxu0 0.0
      %578 = vmatpush2.msra.mxu0 0.0
      %579 = vmatprep.subr.mxu0 0.0
      %580 = vmatpush2.msra.mxu0 0.0
      %581 = vmatprep.subr.mxu0 0.0
      %582 = vmatpush2.msra.mxu0 0.0
      %583 = vmatprep.subr.mxu0 0.0
      %584 = vmatpush2.msra.mxu0 0.0
      %585 = vmatprep.mubr.f32.mxu0 0.0
      %v586 = vand.u32 %v212, 4294901760
      %587 = vmatmul.mubr.f32.gmra.mxu0 %v586
      %v588 = vpop.f32.mrf.mxu0
      %v589 = vadd.f32 %v515, %v588
      %v590 = vpop.f32.mrf.mxu0
      %591 = vdwg.mxu0
      %592 = vmatprep.subr.mxu0 0.0
      %593 = vmatpush1.msra.mxu0 0.0
      %594 = vmatprep.subr.mxu0 0.0
      %595 = vmatpush1.msra.mxu0 0.0
      %596 = vmatprep.subr.mxu0 0.0
      %597 = vmatpush1.msra.mxu0 0.0
      %598 = vmatprep.subr.mxu0 0.0
      %599 = vmatpush1.msra.mxu0 0.0
      %600 = vmatprep.subr.mxu0 0.0
      %601 = vmatpush1.msra.mxu0 0.0
      %602 = vmatprep.subr.mxu0 0.0
      %603 = vmatpush1.msra.mxu0 0.0
      %604 = vmatprep.subr.mxu0 0.0
      %605 = vmatpush1.msra.mxu0 0.0
      %606 = vmatprep.subr.mxu0 0.0
      %607 = vmatpush1.msra.mxu0 0.0
      %608 = vmatprep.subr.mxu0 0.0
      %609 = vmatpush1.msra.mxu0 0.0
      %610 = vmatprep.subr.mxu0 0.0
      %611 = vmatpush1.msra.mxu0 0.0
      %612 = vmatprep.subr.mxu0 0.0
      %613 = vmatpush1.msra.mxu0 0.0
      %614 = vmatprep.subr.mxu0 0.0
      %615 = vmatpush1.msra.mxu0 0.0
      %616 = vmatprep.subr.mxu0 0.0
      %617 = vmatpush1.msra.mxu0 0.0
      %618 = vmatprep.subr.mxu0 0.0
      %619 = vmatpush1.msra.mxu0 0.0
      %620 = vmatprep.subr.mxu0 0.0
      %621 = vmatpush1.msra.mxu0 0.0
      %622 = vmatprep.subr.mxu0 0.0
      %v623 = vand.u32 %v216, 4294901760
      %624 = vmatpush1.msra.mxu0 %v623
      %625 = vmatprep.subr.mxu0 0.0
      %626 = vmatpush2.msra.mxu0 0.0
      %627 = vmatprep.subr.mxu0 0.0
      %628 = vmatpush2.msra.mxu0 0.0
      %629 = vmatprep.subr.mxu0 0.0
      %630 = vmatpush2.msra.mxu0 0.0
      %631 = vmatprep.subr.mxu0 0.0
      %632 = vmatpush2.msra.mxu0 0.0
      %633 = vmatprep.subr.mxu0 0.0
      %634 = vmatpush2.msra.mxu0 0.0
      %635 = vmatprep.subr.mxu0 0.0
      %636 = vmatpush2.msra.mxu0 0.0
      %637 = vmatprep.subr.mxu0 0.0
      %638 = vmatpush2.msra.mxu0 0.0
      %639 = vmatprep.subr.mxu0 0.0
      %640 = vmatpush2.msra.mxu0 0.0
      %641 = vmatprep.subr.mxu0 0.0
      %642 = vmatpush2.msra.mxu0 0.0
      %643 = vmatprep.subr.mxu0 0.0
      %644 = vmatpush2.msra.mxu0 0.0
      %645 = vmatprep.subr.mxu0 0.0
      %646 = vmatpush2.msra.mxu0 0.0
      %647 = vmatprep.subr.mxu0 0.0
      %648 = vmatpush2.msra.mxu0 0.0
      %649 = vmatprep.subr.mxu0 0.0
      %650 = vmatpush2.msra.mxu0 0.0
      %651 = vmatprep.subr.mxu0 0.0
      %652 = vmatpush2.msra.mxu0 0.0
      %653 = vmatprep.subr.mxu0 0.0
      %654 = vmatpush2.msra.mxu0 0.0
      %655 = vmatprep.subr.mxu0 0.0
      %656 = vmatpush2.msra.mxu0 0.0
      %657 = vmatprep.mubr.f32.mxu0 0.0
      %v658 = vand.u32 %v212, 4294901760
      %659 = vmatmul.mubr.f32.gmra.mxu0 %v658
      %v660 = vpop.f32.mrf.mxu0
      %v661 = vadd.f32 %v589, %v660
      %v662 = vpop.f32.mrf.mxu0
      %663 = vdwg.mxu0
      %664 = vst [vmem:[%s201] sm:$0xff] %v661
      %p665 = scmp.lt.s32.totalorder %s19, 1
      %s666 = scalar_select %p665, %s19, 1
      %p667 = scmp.lt.s32.totalorder %s18, 1
      %s668 = scalar_select %p667, %s18, 1
      %s669 = smul.addr %s666, 2
      %s670 = sadd.s32 %s668, %s669
      %s671 = smul.addr %s670, 8
      %s672 = scalar_lea.vmem %s3, %s671
      // Predicated region
      $region33: #{linear_mapping_layer.1} parent=31 // pred_check
        %p673 = pneg %p116
      $region34: #{linear_mapping_layer.1} parent=31 // pred_check_branch
        %675 = sbr.rel (%p673) target = $region36
      $region35: #{linear_mapping_layer.1} parent=31 // pred_region
        _
      $region36: #{linear_mapping_layer.1} parent=31 // pred_fallthru
        _
    $region32: #{linear_mapping_layer.1} parent=5 // pred_fallthru
      _
    %p676 = scmp.le.s32.totalorder 2, %s9
    // Predicated region
    $region37: #{linear_mapping_layer.1} parent=5 // pred_check
      %p677 = pneg %p676
    $region38: #{linear_mapping_layer.1} parent=5 // pred_check_branch
      %679 = sbr.rel (%p677) target = $region40
    $region39: #{linear_mapping_layer.1} parent=5 // pred_region
      %s680 = ssub.s32 %s9, 2
      // Predicated region
      $region41: #{linear_mapping_layer.1} parent=39 // pred_check
        %p681 = pneg %p122
      $region42: #{linear_mapping_layer.1} parent=39 // pred_check_branch
        %683 = sbr.rel (%p681) target = $region44
      $region43: #{linear_mapping_layer.1} parent=39 // pred_region
        %p684 = scmp.lt.s32.totalorder %s21, 1
        %s685 = scalar_select %p684, %s21, 1
        %p686 = scmp.lt.s32.totalorder %s20, 1
        %s687 = scalar_select %p686, %s20, 1
        %s688 = smul.addr %s685, 2
        %s689 = sadd.s32 %s687, %s688
        %s690 = smul.addr %s689, 8
        %s691 = scalar_lea.vmem %s3, %s690
      $region44: #{linear_mapping_layer.1} parent=39 // pred_fallthru
        _
    $region40: #{linear_mapping_layer.1} parent=5 // pred_fallthru
      _
  $region6: #{linear_mapping_layer.1} parent=0 // loop_footer
    %s13 = sadd.s32 1, %s9
  $region7: #{linear_mapping_layer.1} parent=0 // loop_footer_branch
    %8 = sbr.rel target = $region3
  $region8: #{linear_mapping_layer.1} parent=0 // loop_exit
    _

</llo_original>
